<compile_context>
chip_gen: v7x
topology: tpu7x:2x2x1
jax: 0.10.0
libtpu: 0.0.40
codegen_flags: <defaults>
</compile_context>

<pallas_src>
import jax
import jax.numpy as jnp
from jax.experimental import pallas as pl
from jax.experimental.pallas import tpu as pltpu


# ----------------------------------------------------------------------------
# Kernel: per batch element, conv1x1 (bias folded) + bilinear upsample as matmuls.
# ----------------------------------------------------------------------------
def flow_kernel(x_ref, w_ref, m_ref, out_ref):
    # x_ref:   (1, C_in+1, Ni)   flattened image + trailing ones-row (bias)
    # w_ref:   (C_out, C_in+1)   conv weight with bias column appended
    # m_ref:   (Ni, No)          transposed bilinear interpolation matrix kron(Ry, Rx)^T
    # out_ref: (1, C_out, No)
    y = jnp.dot(w_ref[...], x_ref[0],
                preferred_element_type=jnp.float32)          # (C_out, Ni)  == conv1x1 + bias
    out_ref[0] = jnp.dot(y, m_ref[...],
                         preferred_element_type=jnp.float32)  # (C_out, No)  == bilinear upsample


# ----------------------------------------------------------------------------
# Host-side helpers.
# ----------------------------------------------------------------------------
def _bilinear_interp_matrix(in_size, out_size, align_corners=False):
    """Dense 1-D bilinear interpolation matrix (out_size, in_size), PyTorch semantics."""
    out_idx = jnp.arange(out_size, dtype=jnp.float32)
    if align_corners:
        scale = 0.0 if out_size <= 1 else (in_size - 1) / (out_size - 1)
        src = out_idx * scale
    else:
        scale = in_size / out_size
        src = jnp.maximum((out_idx + 0.5) * scale - 0.5, 0.0)   # clamp like PyTorch
    i0 = jnp.minimum(jnp.floor(src).astype(jnp.int32), in_size - 1)
    i1 = jnp.minimum(i0 + 1, in_size - 1)
    frac = src - i0.astype(jnp.float32)
    rows = jnp.arange(out_size)
    m = jnp.zeros((out_size, in_size), jnp.float32)
    m = m.at[rows, i0].add(1.0 - frac)
    m = m.at[rows, i1].add(frac)
    return m


def flow_module_pallas(x, weight, bias, res_size):
    """x: (B, C_in, Hi, Wi); weight: (C_out, C_in); bias: (C_out,); res_size: (Ho, Wo)."""
    B, C_in, Hi, Wi = x.shape
    C_out = weight.shape[0]
    Ho, Wo = res_size
    Ni = Hi * Wi
    No = Ho * Wo

    # Lane-dense flattening + bias folded into the weight (ones row appended to x).
    x_flat = x.reshape(B, C_in, Ni).astype(jnp.float32)
    x_aug = jnp.concatenate(
        [x_flat, jnp.ones((B, 1, Ni), jnp.float32)], axis=1)             # (B, C_in+1, Ni)
    w_aug = jnp.concatenate(
        [weight.astype(jnp.float32),
         bias.astype(jnp.float32).reshape(C_out, 1)], axis=1)            # (C_out, C_in+1)

    # Separable bilinear resize as one dense matrix: out_flat = y_flat @ kron(Ry, Rx)^T.
    ry = _bilinear_interp_matrix(Hi, Ho)                                 # (Ho, Hi)
    rx = _bilinear_interp_matrix(Wi, Wo)                                 # (Wo, Wi)
    m_t = jnp.kron(ry, rx).T                                             # (Ni, No)

    out_flat = pl.pallas_call(
        flow_kernel,
        out_shape=jax.ShapeDtypeStruct((B, C_out, No), jnp.float32),
        grid_spec=pltpu.PrefetchScalarGridSpec(
            num_scalar_prefetch=0,
            grid=(B,),
            in_specs=[
                pl.BlockSpec((1, C_in + 1, Ni), lambda b: (b, 0, 0)),    # x (per batch)
                pl.BlockSpec((C_out, C_in + 1), lambda b: (0, 0)),       # weight (resident)
                pl.BlockSpec((Ni, No), lambda b: (0, 0)),                # interp matrix (resident)
            ],
            out_specs=pl.BlockSpec((1, C_out, No), lambda b: (b, 0, 0)),
        ),
        compiler_params=pltpu.CompilerParams(
            dimension_semantics=("parallel",)),                          # v7x: one batch per TC
    )(x_aug, w_aug, m_t)

    return out_flat.reshape(B, C_out, Ho, Wo)


# ----------------------------------------------------------------------------
# Pure-JAX reference (independent of the kernel's interpolation-matrix trick).
# ----------------------------------------------------------------------------
def flow_module_reference(x, weight, bias, res_size):
    y = jnp.einsum("oc,bchw->bohw", weight, x) + bias[None, :, None, None]
    B, C_out = y.shape[:2]
    return jax.image.resize(y, (B, C_out, res_size[0], res_size[1]), method="bilinear")


if __name__ == "__main__":
    # FlowModule_SingleScale(input_channels=4, NoLabels=8); x: (2, 4, 16, 16); res_size=(32, 32)
    B, C_in, Hi, Wi = 2, 4, 16, 16
    NoLabels = 8
    res_size = (32, 32)

    key = jax.random.PRNGKey(0)
    k1, k2, k3 = jax.random.split(key, 3)
    x = jax.random.normal(k1, (B, C_in, Hi, Wi), jnp.float32)
    weight = jax.random.normal(k2, (NoLabels, C_in), jnp.float32) * 0.1
    bias = jax.random.normal(k3, (NoLabels,), jnp.float32) * 0.1

    out = flow_module_pallas(x, weight, bias, res_size)
    out = jax.block_until_ready(out)

    ref = flow_module_reference(x, weight, bias, res_size)
    assert out.shape == (B, NoLabels, res_size[0], res_size[1])
    assert jnp.allclose(out, ref, atol=1e-2, rtol=1e-2), "mismatch vs reference"

    print("KERNEL_OK")
</pallas_src>

<mosaic_0001>
module attributes {stable_mosaic.version = 11 : i64} {
  func.func @flow_kernel(%arg0: i32, %arg1: memref<1x5x256xf32, #tpu.memory_space<vmem>>, %arg2: memref<8x5xf32, #tpu.memory_space<vmem>>, %arg3: memref<256x1024xf32, #tpu.memory_space<vmem>>, %arg4: memref<1x8x1024xf32, #tpu.memory_space<vmem>>) attributes {dimension_semantics = [#tpu.dimension_semantics<parallel>], iteration_bounds = array<i64: 2>, scalar_prefetch = 0 : i64, scratch_operands = 0 : i64, tpu.core_type = #tpu.core_type<tc>, window_params = [{transform_indices = @transform_0, window_bounds = array<i64: 1, 5, 256>}, {pipeline_mode = #tpu.pipeline_mode<synchronous>, transform_indices = @transform_1, window_bounds = array<i64: 8, 5>}, {pipeline_mode = #tpu.pipeline_mode<synchronous>, transform_indices = @transform_2, window_bounds = array<i64: 256, 1024>}, {transform_indices = @transform_3, window_bounds = array<i64: 1, 8, 1024>}]} {
    %c0 = arith.constant 0 : index
    %c0_0 = arith.constant 0 : index
    %0 = vector.load %arg2[%c0, %c0_0] : memref<8x5xf32, #tpu.memory_space<vmem>>, vector<8x5xf32>
    %c0_1 = arith.constant 0 : index
    %c0_2 = arith.constant 0 : index
    %c0_3 = arith.constant 0 : index
    %1 = vector.load %arg1[%c0_1, %c0_2, %c0_3] : memref<1x5x256xf32, #tpu.memory_space<vmem>>, vector<1x5x256xf32>
    %2 = vector.shape_cast %1 : vector<1x5x256xf32> to vector<5x256xf32>
    %cst = arith.constant dense<0.000000e+00> : vector<8x256xf32>
    %3 = tpu.matmul %0, %2, %cst {dimension_numbers = #tpu.dot_dimension_numbers<[1], [0], [0], [1], [0, 0, 1, 1], [], []>} : vector<8x5xf32>, vector<5x256xf32>, vector<8x256xf32> -> vector<8x256xf32>
    %c0_4 = arith.constant 0 : index
    %c0_5 = arith.constant 0 : index
    %4 = vector.load %arg3[%c0_4, %c0_5] : memref<256x1024xf32, #tpu.memory_space<vmem>>, vector<256x1024xf32>
    %cst_6 = arith.constant dense<0.000000e+00> : vector<8x1024xf32>
    %5 = tpu.matmul %3, %4, %cst_6 {dimension_numbers = #tpu.dot_dimension_numbers<[1], [0], [0], [1], [0, 0, 1, 1], [], []>} : vector<8x256xf32>, vector<256x1024xf32>, vector<8x1024xf32> -> vector<8x1024xf32>
    %c0_7 = arith.constant 0 : index
    %c0_8 = arith.constant 0 : index
    %c0_9 = arith.constant 0 : index
    %6 = vector.load %arg4[%c0_7, %c0_8, %c0_9] : memref<1x8x1024xf32, #tpu.memory_space<vmem>>, vector<1x8x1024xf32>
    %7 = vector.shape_cast %6 : vector<1x8x1024xf32> to vector<8x1024xf32>
    %8 = vector.shape_cast %5 : vector<8x1024xf32> to vector<1x8x1024xf32>
    tpu.vector_store %arg4[%c0_7, %c0_8, %c0_9], %8 {strides = array<i32>} : memref<1x8x1024xf32, #tpu.memory_space<vmem>>, vector<1x8x1024xf32>,
    return
  }
  func.func @transform_0(%arg0: i32) -> (i32, i32, i32) {
    %c0_i32 = arith.constant 0 : i32
    %c0_i32_0 = arith.constant 0 : i32
    %c0_i32_1 = arith.constant 0 : i32
    return %arg0, %c0_i32, %c0_i32_0 : i32, i32, i32
  }
  func.func @transform_1(%arg0: i32) -> (i32, i32) {
    %c0_i32 = arith.constant 0 : i32
    %c0_i32_0 = arith.constant 0 : i32
    %c0_i32_1 = arith.constant 0 : i32
    return %c0_i32, %c0_i32_0 : i32, i32
  }
  func.func @transform_2(%arg0: i32) -> (i32, i32) {
    %c0_i32 = arith.constant 0 : i32
    %c0_i32_0 = arith.constant 0 : i32
    %c0_i32_1 = arith.constant 0 : i32
    return %c0_i32, %c0_i32_0 : i32, i32
  }
  func.func @transform_3(%arg0: i32) -> (i32, i32, i32) {
    %c0_i32 = arith.constant 0 : i32
    %c0_i32_0 = arith.constant 0 : i32
    %c0_i32_1 = arith.constant 0 : i32
    return %arg0, %c0_i32, %c0_i32_0 : i32, i32, i32
  }
}

</mosaic_0001>

<llo_original>
// kernel: tpu_custom_call.1
$region0: #{tpu_custom_call.1}
  #allocation0 [shape = 'u32[]', space=smem, size = 0x4, offset = 0x4, fixed_abs, tag = 'smem constant byte address 0x4 - core index']
  #allocation1 [shape = 'u32[144,128]{1,0:T(1,128)}', space=vmem, size = 0x12000, scoped, tag = 'internal scratch']
  %s0 = inlined_call_operand.vmem [shape: f32[2,5,256], index: 0, kind: input, shape index: {}]
  %s1 = inlined_call_operand.vmem [shape: f32[8,5], index: 1, kind: input, shape index: {}]
  %s2 = inlined_call_operand.hbm [shape: f32[256,1024], index: 2, kind: input, shape index: {}]
  %s3 = inlined_call_operand.hbm [shape: f32[2,8,1024], index: 3, kind: output, shape index: {}]
  %s4 = sld [smem:[#allocation0]]
  $region49: #{tpu_custom_call.1} parent=0
    _
  %s6 = ssub.s32 1, %s4
  %s7 = scalar_select 0, %s6, %s4
  $region1: #{tpu_custom_call.1} parent=0
    #allocation2 [shape = 'u8[1048576]{0}', space=vmem, size = 0x100000, scoped, tag = 'input window, operand 2, single buffered']
    #allocation3 [shape = 's32[2]{0}', space=sflag, size = 0x8, scoped, tag = 'scoped memory for tpu_custom_call.1']
    #allocation4 [shape = 's32[2]{0}', space=sflag, size = 0x8, scoped, tag = 'scoped memory for tpu_custom_call.1']
    #allocation5 [shape = 'u8[65536]{0}', space=vmem, size = 0x10000, scoped, tag = 'output window, operand 0']
    %8 = vsyncpa [#allocation3], 0
    %9 = vsyncpa [#allocation4], 0
    %s10 = scalar_lea.sflag [#allocation4], 1
    %11 = vsyncpa %s10, 0
    loop: start=0, step=1, limit=4
    $region2: #{tpu_custom_call.1} parent=1 // loop_pre_header
      _
    $region3: #{tpu_custom_call.1} parent=1 // loop_header
      %s13 = sphi 0, %s17
      %p14 = scmp.ge.s32.totalorder %s13, 4
      %s23 = sphi 0, %s25
      %s26 = sphi 0, %s23
      %s27 = sphi 0, %s26
      %s43 = sphi 0, %s27
      %s47 = sphi 0, %s47
      %s49 = sphi 0, %s47
      %s50 = sphi 0, %s49
      %s64 = sphi 0, %s50
      %s68 = sphi 0, %s68
      %s70 = sphi 0, %s68
      %s71 = sphi 0, %s70
      %s85 = sphi 0, %s71
      %s91 = sphi 0, %s93
      %s94 = sphi 0, %s91
      %s95 = sphi 0, %s94
      %s111 = sphi 0, %s95
    $region4: #{tpu_custom_call.1} parent=1 // loop_header_branch
      %16 = sbr.rel (%p14) target = $region8
    $region5: #{tpu_custom_call.1} parent=1 // loop_body
      %s18 = ssub.s32 %s13, 1
      %s19 = ssub.s32 %s13, 2
      %s20 = sadd.s32 %s13, 1
      %s21 = ssub.s32 %s13, %s20
      %p22 = scmp.eq.s32.totalorder %s21, 0
      %s24 = sadd.s32 %s23, 1
      %s25 = scalar_select %p22, %s23, %s24
      %p28 = pneg %p22
      %p29 = scmp.eq.s32.totalorder %s13, 1
      %p30 = por %p28, %p29
      %p31 = scmp.ne.s32.totalorder %s23, %s26
      %p32 = scmp.eq.s32.totalorder %s13, 0
      %p33 = por %p31, %p32
      %p34 = scmp.ne.s32.totalorder %s23, %s26
      %p35 = scmp.eq.s32.totalorder %s18, 1
      %p36 = por %p34, %p35
      %p37 = scmp.ne.s32.totalorder %s26, %s27
      %p38 = scmp.eq.s32.totalorder %s18, 0
      %p39 = por %p37, %p38
      %p40 = scmp.ne.s32.totalorder %s26, %s27
      %p41 = scmp.eq.s32.totalorder %s19, 1
      %p42 = por %p40, %p41
      %p44 = scmp.ne.s32.totalorder %s27, %s43
      %p45 = scmp.eq.s32.totalorder %s19, 0
      %p46 = por %p44, %p45
      %s48 = sadd.s32 %s47, 1
      %p51 = scmp.eq.s32.totalorder %s13, 1
      %p52 = scmp.ne.s32.totalorder %s47, %s49
      %p53 = scmp.eq.s32.totalorder %s13, 0
      %p54 = por %p52, %p53
      %p55 = scmp.ne.s32.totalorder %s47, %s49
      %p56 = scmp.eq.s32.totalorder %s18, 1
      %p57 = por %p55, %p56
      %p58 = scmp.ne.s32.totalorder %s49, %s50
      %p59 = scmp.eq.s32.totalorder %s18, 0
      %p60 = por %p58, %p59
      %p61 = scmp.ne.s32.totalorder %s49, %s50
      %p62 = scmp.eq.s32.totalorder %s19, 1
      %p63 = por %p61, %p62
      %p65 = scmp.ne.s32.totalorder %s50, %s64
      %p66 = scmp.eq.s32.totalorder %s19, 0
      %p67 = por %p65, %p66
      %s69 = sadd.s32 %s68, 1
      %p72 = scmp.eq.s32.totalorder %s13, 1
      %p73 = scmp.ne.s32.totalorder %s68, %s70
      %p74 = scmp.eq.s32.totalorder %s13, 0
      %p75 = por %p73, %p74
      %p76 = scmp.ne.s32.totalorder %s68, %s70
      %p77 = scmp.eq.s32.totalorder %s18, 1
      %p78 = por %p76, %p77
      %p79 = scmp.ne.s32.totalorder %s70, %s71
      %p80 = scmp.eq.s32.totalorder %s18, 0
      %p81 = por %p79, %p80
      %p82 = scmp.ne.s32.totalorder %s70, %s71
      %p83 = scmp.eq.s32.totalorder %s19, 1
      %p84 = por %p82, %p83
      %p86 = scmp.ne.s32.totalorder %s71, %s85
      %p87 = scmp.eq.s32.totalorder %s19, 0
      %p88 = por %p86, %p87
      %s89 = ssub.s32 %s13, %s20
      %p90 = scmp.eq.s32.totalorder %s89, 0
      %s92 = sadd.s32 %s91, 1
      %s93 = scalar_select %p90, %s91, %s92
      %p96 = pneg %p90
      %p97 = scmp.eq.s32.totalorder %s13, 1
      %p98 = por %p96, %p97
      %p99 = scmp.ne.s32.totalorder %s91, %s94
      %p100 = scmp.eq.s32.totalorder %s13, 0
      %p101 = por %p99, %p100
      %p102 = scmp.ne.s32.totalorder %s91, %s94
      %p103 = scmp.eq.s32.totalorder %s18, 1
      %p104 = por %p102, %p103
      %p105 = scmp.ne.s32.totalorder %s94, %s95
      %p106 = scmp.eq.s32.totalorder %s18, 0
      %p107 = por %p105, %p106
      %p108 = scmp.ne.s32.totalorder %s94, %s95
      %p109 = scmp.eq.s32.totalorder %s19, 1
      %p110 = por %p108, %p109
      %p112 = scmp.ne.s32.totalorder %s95, %s111
      %p113 = scmp.eq.s32.totalorder %s19, 0
      %p114 = por %p112, %p113
      %p115 = scmp.le.s32.totalorder 1, %s13
      %p116 = scmp.lt.s32.totalorder %s13, 3
      %p117 = pnand %p115, %p116
      %p118 = pneg %p117
      // Predicated region
      $region9: #{tpu_custom_call.1} parent=5 // pred_check
        _
      $region10: #{tpu_custom_call.1} parent=5 // pred_check_branch
        %120 = sbr.rel (%p117) target = $region12
      $region11: #{tpu_custom_call.1} parent=5 // pred_region
        %s121 = ssub.s32 %s13, 1
        // Predicated region
        $region13: #{tpu_custom_call.1} parent=11 // pred_check
          %p122 = pneg %p60
        $region14: #{tpu_custom_call.1} parent=11 // pred_check_branch
          %124 = sbr.rel (%p122) target = $region16
        $region15: #{tpu_custom_call.1} parent=11 // pred_region
          _
        $region16: #{tpu_custom_call.1} parent=11 // pred_fallthru
          _
        // Predicated region
        $region17: #{tpu_custom_call.1} parent=11 // pred_check
          %p125 = pneg %p81
        $region18: #{tpu_custom_call.1} parent=11 // pred_check_branch
          %127 = sbr.rel (%p125) target = $region20
        $region19: #{tpu_custom_call.1} parent=11 // pred_region
          %s129 = ssub.s32 32768, 32768
          %130 = vsyncadd [#allocation3], %s129
          %s131 = sshll.u32 [#allocation2], 4
          %s132 = int_to_ptr.vmem [resolvable:$true] %s131
          %137 = dma.hbm_to_vmem [thread:$0]  %s2, 32768, %s132, [#allocation3], 1024, 1024, 64
        $region20: #{tpu_custom_call.1} parent=11 // pred_fallthru
          _
      $region12: #{tpu_custom_call.1} parent=5 // pred_fallthru
        _
      %p138 = scmp.lt.s32.totalorder %s13, 2
      // Predicated region
      $region21: #{tpu_custom_call.1} parent=5 // pred_check
        %p139 = pneg %p138
      $region22: #{tpu_custom_call.1} parent=5 // pred_check_branch
        %141 = sbr.rel (%p139) target = $region24
      $region23: #{tpu_custom_call.1} parent=5 // pred_region
        // Predicated region
        $region25: #{tpu_custom_call.1} parent=23 // pred_check
          %p142 = pneg %p33
        $region26: #{tpu_custom_call.1} parent=23 // pred_check_branch
          %144 = sbr.rel (%p142) target = $region28
        $region27: #{tpu_custom_call.1} parent=23 // pred_region
          %p145 = scmp.lt.s32.totalorder %s13, 1
          %s146 = scalar_select %p145, %s13, 1
          %s147 = smul.addr %s146, 2
          %s148 = smul.addr %s147, 8
          %s149 = scalar_lea.vmem %s0, %s148
        $region28: #{tpu_custom_call.1} parent=23 // pred_fallthru
          _
      $region24: #{tpu_custom_call.1} parent=5 // pred_fallthru
        _
      %p150 = scmp.le.s32.totalorder 1, %s13
      %p151 = scmp.lt.s32.totalorder %s13, 3
      %p152 = pnand %p150, %p151
      %p153 = pneg %p152
      // Predicated region
      $region29: #{tpu_custom_call.1} parent=5 // pred_check
        _
      $region30: #{tpu_custom_call.1} parent=5 // pred_check_branch
        %155 = sbr.rel (%p152) target = $region32
      $region31: #{tpu_custom_call.1} parent=5 // pred_region
        %s156 = ssub.s32 %s13, 1
        // Predicated region
        $region33: #{tpu_custom_call.1} parent=31 // pred_check
          %p157 = pneg %p81
        $region34: #{tpu_custom_call.1} parent=31 // pred_check_branch
          %159 = sbr.rel (%p157) target = $region36
        $region35: #{tpu_custom_call.1} parent=31 // pred_region
          %160 = dma.done [#allocation3], 32768
        $region36: #{tpu_custom_call.1} parent=31 // pred_fallthru
          _
        %p161 = scmp.lt.s32.totalorder %s18, 1
        %s162 = scalar_select %p161, %s18, 1
        %s163 = smul.addr %s162, 2
        %s164 = smul.addr %s163, 8
        %s165 = scalar_lea.vmem %s0, %s164
        %p166 = pneg %p39
        %p167 = pneg %p36
        %p168 = pneg %p60
        %p169 = pneg %p57
        %p170 = pneg %p81
        %p171 = pneg %p78
        %p172 = pneg %p107
        %p173 = pneg %p104
        %s174 = sand.u32 %s94, 1
        %s175 = scalar_lea.sflag [#allocation4], %s174
        %s176 = sand.u32 %s94, 1
        %s177 = smul.addr %s176, 64
        %s178 = scalar_lea.vmem [#allocation5], %s177
        %p179 = scmp.lt.s32.totalorder %s18, 1
        %s180 = scalar_select %p179, %s18, 1
        %s181 = smul.addr %s180, 2
        %s182 = smul.addr %s181, 8
        %s183 = scalar_lea.vmem %s0, %s182
        %v184 = vld [vmem:[%s1] sm:$0xff]
        %v185 = vld [vmem:[%s183] sm:$0x1f]
        %v186 = vld [vmem:[%s183 + $0x8] sm:$0x1f]
        %vm187 = vcmask 39936
        %v189 = vsel %vm187, %v184, 0
        %vm191 = vcmask 1044480
        %v193 = vsel %vm191, %v185, 0
        %v196 = vsel %vm191, %v186, 0
        %198 = vmatprep.subr.mxu0 %v196
        %199 = vmatpush1.msra.mxu0 %v193
        %200 = vmatprep.subr.mxu0 0.0
        %201 = vmatpush1.msra.mxu0 0.0
        %202 = vmatprep.subr.mxu0 0.0
        %203 = vmatpush1.msra.mxu0 0.0
        %204 = vmatprep.subr.mxu0 0.0
        %205 = vmatpush1.msra.mxu0 0.0
        %206 = vmatprep.subr.mxu0 0.0
        %207 = vmatpush1.msra.mxu0 0.0
        %208 = vmatprep.subr.mxu0 0.0
        %209 = vmatpush1.msra.mxu0 0.0
        %210 = vmatprep.subr.mxu0 0.0
        %211 = vmatpush1.msra.mxu0 0.0
        %212 = vmatprep.subr.mxu0 0.0
        %213 = vmatpush1.msra.mxu0 0.0
        %214 = vmatprep.subr.mxu0 0.0
        %215 = vmatpush1.msra.mxu0 0.0
        %216 = vmatprep.subr.mxu0 0.0
        %217 = vmatpush1.msra.mxu0 0.0
        %218 = vmatprep.subr.mxu0 0.0
        %219 = vmatpush1.msra.mxu0 0.0
        %220 = vmatprep.subr.mxu0 0.0
        %221 = vmatpush1.msra.mxu0 0.0
        %222 = vmatprep.subr.mxu0 0.0
        %223 = vmatpush1.msra.mxu0 0.0
        %224 = vmatprep.subr.mxu0 0.0
        %225 = vmatpush1.msra.mxu0 0.0
        %226 = vmatprep.subr.mxu0 0.0
        %227 = vmatpush1.msra.mxu0 0.0
        %228 = vmatprep.subr.mxu0 0.0
        %229 = vmatpush1.msra.mxu0 0.0
        %230 = vmatprep.subr.mxu0 0.0
        %231 = vmatpush1.msra.mxu0 0.0
        %232 = vmatprep.subr.mxu0 0.0
        %233 = vmatpush1.msra.mxu0 0.0
        %234 = vmatprep.subr.mxu0 0.0
        %235 = vmatpush1.msra.mxu0 0.0
        %236 = vmatprep.subr.mxu0 0.0
        %237 = vmatpush1.msra.mxu0 0.0
        %238 = vmatprep.subr.mxu0 0.0
        %239 = vmatpush1.msra.mxu0 0.0
        %240 = vmatprep.subr.mxu0 0.0
        %241 = vmatpush1.msra.mxu0 0.0
        %242 = vmatprep.subr.mxu0 0.0
        %243 = vmatpush1.msra.mxu0 0.0
        %244 = vmatprep.subr.mxu0 0.0
        %245 = vmatpush1.msra.mxu0 0.0
        %246 = vmatprep.subr.mxu0 0.0
        %247 = vmatpush1.msra.mxu0 0.0
        %248 = vmatprep.subr.mxu0 0.0
        %249 = vmatpush1.msra.mxu0 0.0
        %250 = vmatprep.subr.mxu0 0.0
        %251 = vmatpush1.msra.mxu0 0.0
        %252 = vmatprep.subr.mxu0 0.0
        %253 = vmatpush1.msra.mxu0 0.0
        %254 = vmatprep.subr.mxu0 0.0
        %255 = vmatpush1.msra.mxu0 0.0
        %256 = vmatprep.subr.mxu0 0.0
        %257 = vmatpush1.msra.mxu0 0.0
        %258 = vmatprep.subr.mxu0 0.0
        %259 = vmatpush1.msra.mxu0 0.0
        %260 = vmatprep.subr.mxu0 0.0
        %261 = vmatpush1.msra.mxu0 0.0
        %262 = vmatprep.mubr.f32.mxu0 0.0
        %263 = vmatmul.mubr.f32.gmra.mrb[0].mxu0 %v189
        %v264 = vpop.f32.mrb[0].mxu0
        %v265 = vadd.f32 0.0, %v264
        %v266 = vpop.f32.mrb[0].mxu0
        %v267 = vadd.f32 0.0, %v266
        %268 = vdwg.mxu0
        %v269 = vld [vmem:[#allocation2] sm:$0xff]
        %v270 = vld [vmem:[#allocation2 + $0x8] sm:$0xff]
        %v271 = vld [vmem:[#allocation2 + $0x10] sm:$0xff]
        %v272 = vld [vmem:[#allocation2 + $0x18] sm:$0xff]
        %v273 = vld [vmem:[#allocation2 + $0x20] sm:$0xff]
        %v274 = vld [vmem:[#allocation2 + $0x28] sm:$0xff]
        %v275 = vld [vmem:[#allocation2 + $0x30] sm:$0xff]
        %v276 = vld [vmem:[#allocation2 + $0x38] sm:$0xff]
        %v277 = vld [vmem:[#allocation2 + $0x40] sm:$0xff]
        %v278 = vld [vmem:[#allocation2 + $0x48] sm:$0xff]
        %v279 = vld [vmem:[#allocation2 + $0x50] sm:$0xff]
        %v280 = vld [vmem:[#allocation2 + $0x58] sm:$0xff]
        %v281 = vld [vmem:[#allocation2 + $0x60] sm:$0xff]
        %v282 = vld [vmem:[#allocation2 + $0x68] sm:$0xff]
        %v283 = vld [vmem:[#allocation2 + $0x70] sm:$0xff]
        %v284 = vld [vmem:[#allocation2 + $0x78] sm:$0xff]
        %v285 = vld [vmem:[#allocation2 + $0x80] sm:$0xff]
        %v286 = vld [vmem:[#allocation2 + $0x88] sm:$0xff]
        %v287 = vld [vmem:[#allocation2 + $0x90] sm:$0xff]
        %v288 = vld [vmem:[#allocation2 + $0x98] sm:$0xff]
        %v289 = vld [vmem:[#allocation2 + $0xa0] sm:$0xff]
        %v290 = vld [vmem:[#allocation2 + $0xa8] sm:$0xff]
        %v291 = vld [vmem:[#allocation2 + $0xb0] sm:$0xff]
        %v292 = vld [vmem:[#allocation2 + $0xb8] sm:$0xff]
        %v293 = vld [vmem:[#allocation2 + $0xc0] sm:$0xff]
        %v294 = vld [vmem:[#allocation2 + $0xc8] sm:$0xff]
        %v295 = vld [vmem:[#allocation2 + $0xd0] sm:$0xff]
        %v296 = vld [vmem:[#allocation2 + $0xd8] sm:$0xff]
        %v297 = vld [vmem:[#allocation2 + $0xe0] sm:$0xff]
        %v298 = vld [vmem:[#allocation2 + $0xe8] sm:$0xff]
        %v299 = vld [vmem:[#allocation2 + $0xf0] sm:$0xff]
        %v300 = vld [vmem:[#allocation2 + $0xf8] sm:$0xff]
        %v301 = vld [vmem:[#allocation2 + $0x100] sm:$0xff]
        %v302 = vld [vmem:[#allocation2 + $0x108] sm:$0xff]
        %v303 = vld [vmem:[#allocation2 + $0x110] sm:$0xff]
        %v304 = vld [vmem:[#allocation2 + $0x118] sm:$0xff]
        %v305 = vld [vmem:[#allocation2 + $0x120] sm:$0xff]
        %v306 = vld [vmem:[#allocation2 + $0x128] sm:$0xff]
        %v307 = vld [vmem:[#allocation2 + $0x130] sm:$0xff]
        %v308 = vld [vmem:[#allocation2 + $0x138] sm:$0xff]
        %v309 = vld [vmem:[#allocation2 + $0x140] sm:$0xff]
        %v310 = vld [vmem:[#allocation2 + $0x148] sm:$0xff]
        %v311 = vld [vmem:[#allocation2 + $0x150] sm:$0xff]
        %v312 = vld [vmem:[#allocation2 + $0x158] sm:$0xff]
        %v313 = vld [vmem:[#allocation2 + $0x160] sm:$0xff]
        %v314 = vld [vmem:[#allocation2 + $0x168] sm:$0xff]
        %v315 = vld [vmem:[#allocation2 + $0x170] sm:$0xff]
        %v316 = vld [vmem:[#allocation2 + $0x178] sm:$0xff]
        %v317 = vld [vmem:[#allocation2 + $0x180] sm:$0xff]
        %v318 = vld [vmem:[#allocation2 + $0x188] sm:$0xff]
        %v319 = vld [vmem:[#allocation2 + $0x190] sm:$0xff]
        %v320 = vld [vmem:[#allocation2 + $0x198] sm:$0xff]
        %v321 = vld [vmem:[#allocation2 + $0x1a0] sm:$0xff]
        %v322 = vld [vmem:[#allocation2 + $0x1a8] sm:$0xff]
        %v323 = vld [vmem:[#allocation2 + $0x1b0] sm:$0xff]
        %v324 = vld [vmem:[#allocation2 + $0x1b8] sm:$0xff]
        %v325 = vld [vmem:[#allocation2 + $0x1c0] sm:$0xff]
        %v326 = vld [vmem:[#allocation2 + $0x1c8] sm:$0xff]
        %v327 = vld [vmem:[#allocation2 + $0x1d0] sm:$0xff]
        %v328 = vld [vmem:[#allocation2 + $0x1d8] sm:$0xff]
        %v329 = vld [vmem:[#allocation2 + $0x1e0] sm:$0xff]
        %v330 = vld [vmem:[#allocation2 + $0x1e8] sm:$0xff]
        %v331 = vld [vmem:[#allocation2 + $0x1f0] sm:$0xff]
        %v332 = vld [vmem:[#allocation2 + $0x1f8] sm:$0xff]
        %v333 = vld [vmem:[#allocation2 + $0x200] sm:$0xff]
        %v334 = vld [vmem:[#allocation2 + $0x208] sm:$0xff]
        %v335 = vld [vmem:[#allocation2 + $0x210] sm:$0xff]
        %v336 = vld [vmem:[#allocation2 + $0x218] sm:$0xff]
        %v337 = vld [vmem:[#allocation2 + $0x220] sm:$0xff]
        %v338 = vld [vmem:[#allocation2 + $0x228] sm:$0xff]
        %v339 = vld [vmem:[#allocation2 + $0x230] sm:$0xff]
        %v340 = vld [vmem:[#allocation2 + $0x238] sm:$0xff]
        %v341 = vld [vmem:[#allocation2 + $0x240] sm:$0xff]
        %v342 = vld [vmem:[#allocation2 + $0x248] sm:$0xff]
        %v343 = vld [vmem:[#allocation2 + $0x250] sm:$0xff]
        %v344 = vld [vmem:[#allocation2 + $0x258] sm:$0xff]
        %v345 = vld [vmem:[#allocation2 + $0x260] sm:$0xff]
        %v346 = vld [vmem:[#allocation2 + $0x268] sm:$0xff]
        %v347 = vld [vmem:[#allocation2 + $0x270] sm:$0xff]
        %v348 = vld [vmem:[#allocation2 + $0x278] sm:$0xff]
        %v349 = vld [vmem:[#allocation2 + $0x280] sm:$0xff]
        %v350 = vld [vmem:[#allocation2 + $0x288] sm:$0xff]
        %v351 = vld [vmem:[#allocation2 + $0x290] sm:$0xff]
        %v352 = vld [vmem:[#allocation2 + $0x298] sm:$0xff]
        %v353 = vld [vmem:[#allocation2 + $0x2a0] sm:$0xff]
        %v354 = vld [vmem:[#allocation2 + $0x2a8] sm:$0xff]
        %v355 = vld [vmem:[#allocation2 + $0x2b0] sm:$0xff]
        %v356 = vld [vmem:[#allocation2 + $0x2b8] sm:$0xff]
        %v357 = vld [vmem:[#allocation2 + $0x2c0] sm:$0xff]
        %v358 = vld [vmem:[#allocation2 + $0x2c8] sm:$0xff]
        %v359 = vld [vmem:[#allocation2 + $0x2d0] sm:$0xff]
        %v360 = vld [vmem:[#allocation2 + $0x2d8] sm:$0xff]
        %v361 = vld [vmem:[#allocation2 + $0x2e0] sm:$0xff]
        %v362 = vld [vmem:[#allocation2 + $0x2e8] sm:$0xff]
        %v363 = vld [vmem:[#allocation2 + $0x2f0] sm:$0xff]
        %v364 = vld [vmem:[#allocation2 + $0x2f8] sm:$0xff]
        %v365 = vld [vmem:[#allocation2 + $0x300] sm:$0xff]
        %v366 = vld [vmem:[#allocation2 + $0x308] sm:$0xff]
        %v367 = vld [vmem:[#allocation2 + $0x310] sm:$0xff]
        %v368 = vld [vmem:[#allocation2 + $0x318] sm:$0xff]
        %v369 = vld [vmem:[#allocation2 + $0x320] sm:$0xff]
        %v370 = vld [vmem:[#allocation2 + $0x328] sm:$0xff]
        %v371 = vld [vmem:[#allocation2 + $0x330] sm:$0xff]
        %v372 = vld [vmem:[#allocation2 + $0x338] sm:$0xff]
        %v373 = vld [vmem:[#allocation2 + $0x340] sm:$0xff]
        %v374 = vld [vmem:[#allocation2 + $0x348] sm:$0xff]
        %v375 = vld [vmem:[#allocation2 + $0x350] sm:$0xff]
        %v376 = vld [vmem:[#allocation2 + $0x358] sm:$0xff]
        %v377 = vld [vmem:[#allocation2 + $0x360] sm:$0xff]
        %v378 = vld [vmem:[#allocation2 + $0x368] sm:$0xff]
        %v379 = vld [vmem:[#allocation2 + $0x370] sm:$0xff]
        %v380 = vld [vmem:[#allocation2 + $0x378] sm:$0xff]
        %v381 = vld [vmem:[#allocation2 + $0x380] sm:$0xff]
        %v382 = vld [vmem:[#allocation2 + $0x388] sm:$0xff]
        %v383 = vld [vmem:[#allocation2 + $0x390] sm:$0xff]
        %v384 = vld [vmem:[#allocation2 + $0x398] sm:$0xff]
        %v385 = vld [vmem:[#allocation2 + $0x3a0] sm:$0xff]
        %v386 = vld [vmem:[#allocation2 + $0x3a8] sm:$0xff]
        %v387 = vld [vmem:[#allocation2 + $0x3b0] sm:$0xff]
        %v388 = vld [vmem:[#allocation2 + $0x3b8] sm:$0xff]
        %v389 = vld [vmem:[#allocation2 + $0x3c0] sm:$0xff]
        %v390 = vld [vmem:[#allocation2 + $0x3c8] sm:$0xff]
        %v391 = vld [vmem:[#allocation2 + $0x3d0] sm:$0xff]
        %v392 = vld [vmem:[#allocation2 + $0x3d8] sm:$0xff]
        %v393 = vld [vmem:[#allocation2 + $0x3e0] sm:$0xff]
        %v394 = vld [vmem:[#allocation2 + $0x3e8] sm:$0xff]
        %v395 = vld [vmem:[#allocation2 + $0x3f0] sm:$0xff]
        %v396 = vld [vmem:[#allocation2 + $0x3f8] sm:$0xff]
        %v397 = vld [vmem:[#allocation2 + $0x400] sm:$0xff]
        %v398 = vld [vmem:[#allocation2 + $0x408] sm:$0xff]
        %v399 = vld [vmem:[#allocation2 + $0x410] sm:$0xff]
        %v400 = vld [vmem:[#allocation2 + $0x418] sm:$0xff]
        %v401 = vld [vmem:[#allocation2 + $0x420] sm:$0xff]
        %v402 = vld [vmem:[#allocation2 + $0x428] sm:$0xff]
        %v403 = vld [vmem:[#allocation2 + $0x430] sm:$0xff]
        %v404 = vld [vmem:[#allocation2 + $0x438] sm:$0xff]
        %v405 = vld [vmem:[#allocation2 + $0x440] sm:$0xff]
        %v406 = vld [vmem:[#allocation2 + $0x448] sm:$0xff]
        %v407 = vld [vmem:[#allocation2 + $0x450] sm:$0xff]
        %v408 = vld [vmem:[#allocation2 + $0x458] sm:$0xff]
        %v409 = vld [vmem:[#allocation2 + $0x460] sm:$0xff]
        %v410 = vld [vmem:[#allocation2 + $0x468] sm:$0xff]
        %v411 = vld [vmem:[#allocation2 + $0x470] sm:$0xff]
        %v412 = vld [vmem:[#allocation2 + $0x478] sm:$0xff]
        %v413 = vld [vmem:[#allocation2 + $0x480] sm:$0xff]
        %v414 = vld [vmem:[#allocation2 + $0x488] sm:$0xff]
        %v415 = vld [vmem:[#allocation2 + $0x490] sm:$0xff]
        %v416 = vld [vmem:[#allocation2 + $0x498] sm:$0xff]
        %v417 = vld [vmem:[#allocation2 + $0x4a0] sm:$0xff]
        %v418 = vld [vmem:[#allocation2 + $0x4a8] sm:$0xff]
        %v419 = vld [vmem:[#allocation2 + $0x4b0] sm:$0xff]
        %v420 = vld [vmem:[#allocation2 + $0x4b8] sm:$0xff]
        %v421 = vld [vmem:[#allocation2 + $0x4c0] sm:$0xff]
        %v422 = vld [vmem:[#allocation2 + $0x4c8] sm:$0xff]
        %v423 = vld [vmem:[#allocation2 + $0x4d0] sm:$0xff]
        %v424 = vld [vmem:[#allocation2 + $0x4d8] sm:$0xff]
        %v425 = vld [vmem:[#allocation2 + $0x4e0] sm:$0xff]
        %v426 = vld [vmem:[#allocation2 + $0x4e8] sm:$0xff]
        %v427 = vld [vmem:[#allocation2 + $0x4f0] sm:$0xff]
        %v428 = vld [vmem:[#allocation2 + $0x4f8] sm:$0xff]
        %v429 = vld [vmem:[#allocation2 + $0x500] sm:$0xff]
        %v430 = vld [vmem:[#allocation2 + $0x508] sm:$0xff]
        %v431 = vld [vmem:[#allocation2 + $0x510] sm:$0xff]
        %v432 = vld [vmem:[#allocation2 + $0x518] sm:$0xff]
        %v433 = vld [vmem:[#allocation2 + $0x520] sm:$0xff]
        %v434 = vld [vmem:[#allocation2 + $0x528] sm:$0xff]
        %v435 = vld [vmem:[#allocation2 + $0x530] sm:$0xff]
        %v436 = vld [vmem:[#allocation2 + $0x538] sm:$0xff]
        %v437 = vld [vmem:[#allocation2 + $0x540] sm:$0xff]
        %v438 = vld [vmem:[#allocation2 + $0x548] sm:$0xff]
        %v439 = vld [vmem:[#allocation2 + $0x550] sm:$0xff]
        %v440 = vld [vmem:[#allocation2 + $0x558] sm:$0xff]
        %v441 = vld [vmem:[#allocation2 + $0x560] sm:$0xff]
        %v442 = vld [vmem:[#allocation2 + $0x568] sm:$0xff]
        %v443 = vld [vmem:[#allocation2 + $0x570] sm:$0xff]
        %v444 = vld [vmem:[#allocation2 + $0x578] sm:$0xff]
        %v445 = vld [vmem:[#allocation2 + $0x580] sm:$0xff]
        %v446 = vld [vmem:[#allocation2 + $0x588] sm:$0xff]
        %v447 = vld [vmem:[#allocation2 + $0x590] sm:$0xff]
        %v448 = vld [vmem:[#allocation2 + $0x598] sm:$0xff]
        %v449 = vld [vmem:[#allocation2 + $0x5a0] sm:$0xff]
        %v450 = vld [vmem:[#allocation2 + $0x5a8] sm:$0xff]
        %v451 = vld [vmem:[#allocation2 + $0x5b0] sm:$0xff]
        %v452 = vld [vmem:[#allocation2 + $0x5b8] sm:$0xff]
        %v453 = vld [vmem:[#allocation2 + $0x5c0] sm:$0xff]
        %v454 = vld [vmem:[#allocation2 + $0x5c8] sm:$0xff]
        %v455 = vld [vmem:[#allocation2 + $0x5d0] sm:$0xff]
        %v456 = vld [vmem:[#allocation2 + $0x5d8] sm:$0xff]
        %v457 = vld [vmem:[#allocation2 + $0x5e0] sm:$0xff]
        %v458 = vld [vmem:[#allocation2 + $0x5e8] sm:$0xff]
        %v459 = vld [vmem:[#allocation2 + $0x5f0] sm:$0xff]
        %v460 = vld [vmem:[#allocation2 + $0x5f8] sm:$0xff]
        %v461 = vld [vmem:[#allocation2 + $0x600] sm:$0xff]
        %v462 = vld [vmem:[#allocation2 + $0x608] sm:$0xff]
        %v463 = vld [vmem:[#allocation2 + $0x610] sm:$0xff]
        %v464 = vld [vmem:[#allocation2 + $0x618] sm:$0xff]
        %v465 = vld [vmem:[#allocation2 + $0x620] sm:$0xff]
        %v466 = vld [vmem:[#allocation2 + $0x628] sm:$0xff]
        %v467 = vld [vmem:[#allocation2 + $0x630] sm:$0xff]
        %v468 = vld [vmem:[#allocation2 + $0x638] sm:$0xff]
        %v469 = vld [vmem:[#allocation2 + $0x640] sm:$0xff]
        %v470 = vld [vmem:[#allocation2 + $0x648] sm:$0xff]
        %v471 = vld [vmem:[#allocation2 + $0x650] sm:$0xff]
        %v472 = vld [vmem:[#allocation2 + $0x658] sm:$0xff]
        %v473 = vld [vmem:[#allocation2 + $0x660] sm:$0xff]
        %v474 = vld [vmem:[#allocation2 + $0x668] sm:$0xff]
        %v475 = vld [vmem:[#allocation2 + $0x670] sm:$0xff]
        %v476 = vld [vmem:[#allocation2 + $0x678] sm:$0xff]
        %v477 = vld [vmem:[#allocation2 + $0x680] sm:$0xff]
        %v478 = vld [vmem:[#allocation2 + $0x688] sm:$0xff]
        %v479 = vld [vmem:[#allocation2 + $0x690] sm:$0xff]
        %v480 = vld [vmem:[#allocation2 + $0x698] sm:$0xff]
        %v481 = vld [vmem:[#allocation2 + $0x6a0] sm:$0xff]
        %v482 = vld [vmem:[#allocation2 + $0x6a8] sm:$0xff]
        %v483 = vld [vmem:[#allocation2 + $0x6b0] sm:$0xff]
        %v484 = vld [vmem:[#allocation2 + $0x6b8] sm:$0xff]
        %v485 = vld [vmem:[#allocation2 + $0x6c0] sm:$0xff]
        %v486 = vld [vmem:[#allocation2 + $0x6c8] sm:$0xff]
        %v487 = vld [vmem:[#allocation2 + $0x6d0] sm:$0xff]
        %v488 = vld [vmem:[#allocation2 + $0x6d8] sm:$0xff]
        %v489 = vld [vmem:[#allocation2 + $0x6e0] sm:$0xff]
        %v490 = vld [vmem:[#allocation2 + $0x6e8] sm:$0xff]
        %v491 = vld [vmem:[#allocation2 + $0x6f0] sm:$0xff]
        %v492 = vld [vmem:[#allocation2 + $0x6f8] sm:$0xff]
        %v493 = vld [vmem:[#allocation2 + $0x700] sm:$0xff]
        %v494 = vld [vmem:[#allocation2 + $0x708] sm:$0xff]
        %v495 = vld [vmem:[#allocation2 + $0x710] sm:$0xff]
        %v496 = vld [vmem:[#allocation2 + $0x718] sm:$0xff]
        %v497 = vld [vmem:[#allocation2 + $0x720] sm:$0xff]
        %v498 = vld [vmem:[#allocation2 + $0x728] sm:$0xff]
        %v499 = vld [vmem:[#allocation2 + $0x730] sm:$0xff]
        %v500 = vld [vmem:[#allocation2 + $0x738] sm:$0xff]
        %v501 = vld [vmem:[#allocation2 + $0x740] sm:$0xff]
        %v502 = vld [vmem:[#allocation2 + $0x748] sm:$0xff]
        %v503 = vld [vmem:[#allocation2 + $0x750] sm:$0xff]
        %v504 = vld [vmem:[#allocation2 + $0x758] sm:$0xff]
        %v505 = vld [vmem:[#allocation2 + $0x760] sm:$0xff]
        %v506 = vld [vmem:[#allocation2 + $0x768] sm:$0xff]
        %v507 = vld [vmem:[#allocation2 + $0x770] sm:$0xff]
        %v508 = vld [vmem:[#allocation2 + $0x778] sm:$0xff]
        %v509 = vld [vmem:[#allocation2 + $0x780] sm:$0xff]
        %v510 = vld [vmem:[#allocation2 + $0x788] sm:$0xff]
        %v511 = vld [vmem:[#allocation2 + $0x790] sm:$0xff]
        %v512 = vld [vmem:[#allocation2 + $0x798] sm:$0xff]
        %v513 = vld [vmem:[#allocation2 + $0x7a0] sm:$0xff]
        %v514 = vld [vmem:[#allocation2 + $0x7a8] sm:$0xff]
        %v515 = vld [vmem:[#allocation2 + $0x7b0] sm:$0xff]
        %v516 = vld [vmem:[#allocation2 + $0x7b8] sm:$0xff]
        %v517 = vld [vmem:[#allocation2 + $0x7c0] sm:$0xff]
        %v518 = vld [vmem:[#allocation2 + $0x7c8] sm:$0xff]
        %v519 = vld [vmem:[#allocation2 + $0x7d0] sm:$0xff]
        %v520 = vld [vmem:[#allocation2 + $0x7d8] sm:$0xff]
        %v521 = vld [vmem:[#allocation2 + $0x7e0] sm:$0xff]
        %v522 = vld [vmem:[#allocation2 + $0x7e8] sm:$0xff]
        %v523 = vld [vmem:[#allocation2 + $0x7f0] sm:$0xff]
        %v524 = vld [vmem:[#allocation2 + $0x7f8] sm:$0xff]
        %525 = vmatprep.subr.mxu0 %v270
        %526 = vmatpush1.msra.mxu0 %v269
        %527 = vmatprep.subr.mxu0 %v278
        %528 = vmatpush1.msra.mxu0 %v277
        %529 = vmatprep.subr.mxu0 %v286
        %530 = vmatpush1.msra.mxu0 %v285
        %531 = vmatprep.subr.mxu0 %v294
        %532 = vmatpush1.msra.mxu0 %v293
        %533 = vmatprep.subr.mxu0 %v302
        %534 = vmatpush1.msra.mxu0 %v301
        %535 = vmatprep.subr.mxu0 %v310
        %536 = vmatpush1.msra.mxu0 %v309
        %537 = vmatprep.subr.mxu0 %v318
        %538 = vmatpush1.msra.mxu0 %v317
        %539 = vmatprep.subr.mxu0 %v326
        %540 = vmatpush1.msra.mxu0 %v325
        %541 = vmatprep.subr.mxu0 %v334
        %542 = vmatpush1.msra.mxu0 %v333
        %543 = vmatprep.subr.mxu0 %v342
        %544 = vmatpush1.msra.mxu0 %v341
        %545 = vmatprep.subr.mxu0 %v350
        %546 = vmatpush1.msra.mxu0 %v349
        %547 = vmatprep.subr.mxu0 %v358
        %548 = vmatpush1.msra.mxu0 %v357
        %549 = vmatprep.subr.mxu0 %v366
        %550 = vmatpush1.msra.mxu0 %v365
        %551 = vmatprep.subr.mxu0 %v374
        %552 = vmatpush1.msra.mxu0 %v373
        %553 = vmatprep.subr.mxu0 %v382
        %554 = vmatpush1.msra.mxu0 %v381
        %555 = vmatprep.subr.mxu0 %v390
        %556 = vmatpush1.msra.mxu0 %v389
        %557 = vmatprep.subr.mxu0 %v398
        %558 = vmatpush1.msra.mxu0 %v397
        %559 = vmatprep.subr.mxu0 %v406
        %560 = vmatpush1.msra.mxu0 %v405
        %561 = vmatprep.subr.mxu0 %v414
        %562 = vmatpush1.msra.mxu0 %v413
        %563 = vmatprep.subr.mxu0 %v422
        %564 = vmatpush1.msra.mxu0 %v421
        %565 = vmatprep.subr.mxu0 %v430
        %566 = vmatpush1.msra.mxu0 %v429
        %567 = vmatprep.subr.mxu0 %v438
        %568 = vmatpush1.msra.mxu0 %v437
        %569 = vmatprep.subr.mxu0 %v446
        %570 = vmatpush1.msra.mxu0 %v445
        %571 = vmatprep.subr.mxu0 %v454
        %572 = vmatpush1.msra.mxu0 %v453
        %573 = vmatprep.subr.mxu0 %v462
        %574 = vmatpush1.msra.mxu0 %v461
        %575 = vmatprep.subr.mxu0 %v470
        %576 = vmatpush1.msra.mxu0 %v469
        %577 = vmatprep.subr.mxu0 %v478
        %578 = vmatpush1.msra.mxu0 %v477
        %579 = vmatprep.subr.mxu0 %v486
        %580 = vmatpush1.msra.mxu0 %v485
        %581 = vmatprep.subr.mxu0 %v494
        %582 = vmatpush1.msra.mxu0 %v493
        %583 = vmatprep.subr.mxu0 %v502
        %584 = vmatpush1.msra.mxu0 %v501
        %585 = vmatprep.subr.mxu0 %v510
        %586 = vmatpush1.msra.mxu0 %v509
        %587 = vmatprep.subr.mxu0 %v518
        %588 = vmatpush1.msra.mxu0 %v517
        %589 = vmatprep.mubr.f32.mxu0 %v267
        %590 = vmatmul.mubr.f32.gmra.mrb[0].mxu0 %v265
        %v591 = vpop.f32.mrb[0].mxu0
        %v592 = vadd.f32 0.0, %v591
        %v593 = vpop.f32.mrb[0].mxu0
        %v594 = vadd.f32 0.0, %v593
        %595 = vdwg.mxu0
        %596 = vmatprep.subr.mxu0 %v272
        %597 = vmatpush1.msra.mxu0 %v271
        %598 = vmatprep.subr.mxu0 %v280
        %599 = vmatpush1.msra.mxu0 %v279
        %600 = vmatprep.subr.mxu0 %v288
        %601 = vmatpush1.msra.mxu0 %v287
        %602 = vmatprep.subr.mxu0 %v296
        %603 = vmatpush1.msra.mxu0 %v295
        %604 = vmatprep.subr.mxu0 %v304
        %605 = vmatpush1.msra.mxu0 %v303
        %606 = vmatprep.subr.mxu0 %v312
        %607 = vmatpush1.msra.mxu0 %v311
        %608 = vmatprep.subr.mxu0 %v320
        %609 = vmatpush1.msra.mxu0 %v319
        %610 = vmatprep.subr.mxu0 %v328
        %611 = vmatpush1.msra.mxu0 %v327
        %612 = vmatprep.subr.mxu0 %v336
        %613 = vmatpush1.msra.mxu0 %v335
        %614 = vmatprep.subr.mxu0 %v344
        %615 = vmatpush1.msra.mxu0 %v343
        %616 = vmatprep.subr.mxu0 %v352
        %617 = vmatpush1.msra.mxu0 %v351
        %618 = vmatprep.subr.mxu0 %v360
        %619 = vmatpush1.msra.mxu0 %v359
        %620 = vmatprep.subr.mxu0 %v368
        %621 = vmatpush1.msra.mxu0 %v367
        %622 = vmatprep.subr.mxu0 %v376
        %623 = vmatpush1.msra.mxu0 %v375
        %624 = vmatprep.subr.mxu0 %v384
        %625 = vmatpush1.msra.mxu0 %v383
        %626 = vmatprep.subr.mxu0 %v392
        %627 = vmatpush1.msra.mxu0 %v391
        %628 = vmatprep.subr.mxu0 %v400
        %629 = vmatpush1.msra.mxu0 %v399
        %630 = vmatprep.subr.mxu0 %v408
        %631 = vmatpush1.msra.mxu0 %v407
        %632 = vmatprep.subr.mxu0 %v416
        %633 = vmatpush1.msra.mxu0 %v415
        %634 = vmatprep.subr.mxu0 %v424
        %635 = vmatpush1.msra.mxu0 %v423
        %636 = vmatprep.subr.mxu0 %v432
        %637 = vmatpush1.msra.mxu0 %v431
        %638 = vmatprep.subr.mxu0 %v440
        %639 = vmatpush1.msra.mxu0 %v439
        %640 = vmatprep.subr.mxu0 %v448
        %641 = vmatpush1.msra.mxu0 %v447
        %642 = vmatprep.subr.mxu0 %v456
        %643 = vmatpush1.msra.mxu0 %v455
        %644 = vmatprep.subr.mxu0 %v464
        %645 = vmatpush1.msra.mxu0 %v463
        %646 = vmatprep.subr.mxu0 %v472
        %647 = vmatpush1.msra.mxu0 %v471
        %648 = vmatprep.subr.mxu0 %v480
        %649 = vmatpush1.msra.mxu0 %v479
        %650 = vmatprep.subr.mxu0 %v488
        %651 = vmatpush1.msra.mxu0 %v487
        %652 = vmatprep.subr.mxu0 %v496
        %653 = vmatpush1.msra.mxu0 %v495
        %654 = vmatprep.subr.mxu0 %v504
        %655 = vmatpush1.msra.mxu0 %v503
        %656 = vmatprep.subr.mxu0 %v512
        %657 = vmatpush1.msra.mxu0 %v511
        %658 = vmatprep.subr.mxu0 %v520
        %659 = vmatpush1.msra.mxu0 %v519
        %660 = vmatprep.mubr.f32.mxu0 %v267
        %661 = vmatmul.mubr.f32.gmra.mrb[0].mxu0 %v265
        %v662 = vpop.f32.mrb[0].mxu0
        %v663 = vadd.f32 0.0, %v662
        %v664 = vpop.f32.mrb[0].mxu0
        %v665 = vadd.f32 0.0, %v664
        %666 = vdwg.mxu0
        %667 = vmatprep.subr.mxu0 %v274
        %668 = vmatpush1.msra.mxu0 %v273
        %669 = vmatprep.subr.mxu0 %v282
        %670 = vmatpush1.msra.mxu0 %v281
        %671 = vmatprep.subr.mxu0 %v290
        %672 = vmatpush1.msra.mxu0 %v289
        %673 = vmatprep.subr.mxu0 %v298
        %674 = vmatpush1.msra.mxu0 %v297
        %675 = vmatprep.subr.mxu0 %v306
        %676 = vmatpush1.msra.mxu0 %v305
        %677 = vmatprep.subr.mxu0 %v314
        %678 = vmatpush1.msra.mxu0 %v313
        %679 = vmatprep.subr.mxu0 %v322
        %680 = vmatpush1.msra.mxu0 %v321
        %681 = vmatprep.subr.mxu0 %v330
        %682 = vmatpush1.msra.mxu0 %v329
        %683 = vmatprep.subr.mxu0 %v338
        %684 = vmatpush1.msra.mxu0 %v337
        %685 = vmatprep.subr.mxu0 %v346
        %686 = vmatpush1.msra.mxu0 %v345
        %687 = vmatprep.subr.mxu0 %v354
        %688 = vmatpush1.msra.mxu0 %v353
        %689 = vmatprep.subr.mxu0 %v362
        %690 = vmatpush1.msra.mxu0 %v361
        %691 = vmatprep.subr.mxu0 %v370
        %692 = vmatpush1.msra.mxu0 %v369
        %693 = vmatprep.subr.mxu0 %v378
        %694 = vmatpush1.msra.mxu0 %v377
        %695 = vmatprep.subr.mxu0 %v386
        %696 = vmatpush1.msra.mxu0 %v385
        %697 = vmatprep.subr.mxu0 %v394
        %698 = vmatpush1.msra.mxu0 %v393
        %699 = vmatprep.subr.mxu0 %v402
        %700 = vmatpush1.msra.mxu0 %v401
        %701 = vmatprep.subr.mxu0 %v410
        %702 = vmatpush1.msra.mxu0 %v409
        %703 = vmatprep.subr.mxu0 %v418
        %704 = vmatpush1.msra.mxu0 %v417
        %705 = vmatprep.subr.mxu0 %v426
        %706 = vmatpush1.msra.mxu0 %v425
        %707 = vmatprep.subr.mxu0 %v434
        %708 = vmatpush1.msra.mxu0 %v433
        %709 = vmatprep.subr.mxu0 %v442
        %710 = vmatpush1.msra.mxu0 %v441
        %711 = vmatprep.subr.mxu0 %v450
        %712 = vmatpush1.msra.mxu0 %v449
        %713 = vmatprep.subr.mxu0 %v458
        %714 = vmatpush1.msra.mxu0 %v457
        %715 = vmatprep.subr.mxu0 %v466
        %716 = vmatpush1.msra.mxu0 %v465
        %717 = vmatprep.subr.mxu0 %v474
        %718 = vmatpush1.msra.mxu0 %v473
        %719 = vmatprep.subr.mxu0 %v482
        %720 = vmatpush1.msra.mxu0 %v481
        %721 = vmatprep.subr.mxu0 %v490
        %722 = vmatpush1.msra.mxu0 %v489
        %723 = vmatprep.subr.mxu0 %v498
        %724 = vmatpush1.msra.mxu0 %v497
        %725 = vmatprep.subr.mxu0 %v506
        %726 = vmatpush1.msra.mxu0 %v505
        %727 = vmatprep.subr.mxu0 %v514
        %728 = vmatpush1.msra.mxu0 %v513
        %729 = vmatprep.subr.mxu0 %v522
        %730 = vmatpush1.msra.mxu0 %v521
        %731 = vmatprep.mubr.f32.mxu0 %v267
        %732 = vmatmul.mubr.f32.gmra.mrb[0].mxu0 %v265
        %v733 = vpop.f32.mrb[0].mxu0
        %v734 = vadd.f32 0.0, %v733
        %v735 = vpop.f32.mrb[0].mxu0
        %v736 = vadd.f32 0.0, %v735
        %737 = vdwg.mxu0
        %738 = vmatprep.subr.mxu0 %v276
        %739 = vmatpush1.msra.mxu0 %v275
        %740 = vmatprep.subr.mxu0 %v284
        %741 = vmatpush1.msra.mxu0 %v283
        %742 = vmatprep.subr.mxu0 %v292
        %743 = vmatpush1.msra.mxu0 %v291
        %744 = vmatprep.subr.mxu0 %v300
        %745 = vmatpush1.msra.mxu0 %v299
        %746 = vmatprep.subr.mxu0 %v308
        %747 = vmatpush1.msra.mxu0 %v307
        %748 = vmatprep.subr.mxu0 %v316
        %749 = vmatpush1.msra.mxu0 %v315
        %750 = vmatprep.subr.mxu0 %v324
        %751 = vmatpush1.msra.mxu0 %v323
        %752 = vmatprep.subr.mxu0 %v332
        %753 = vmatpush1.msra.mxu0 %v331
        %754 = vmatprep.subr.mxu0 %v340
        %755 = vmatpush1.msra.mxu0 %v339
        %756 = vmatprep.subr.mxu0 %v348
        %757 = vmatpush1.msra.mxu0 %v347
        %758 = vmatprep.subr.mxu0 %v356
        %759 = vmatpush1.msra.mxu0 %v355
        %760 = vmatprep.subr.mxu0 %v364
        %761 = vmatpush1.msra.mxu0 %v363
        %762 = vmatprep.subr.mxu0 %v372
        %763 = vmatpush1.msra.mxu0 %v371
        %764 = vmatprep.subr.mxu0 %v380
        %765 = vmatpush1.msra.mxu0 %v379
        %766 = vmatprep.subr.mxu0 %v388
        %767 = vmatpush1.msra.mxu0 %v387
        %768 = vmatprep.subr.mxu0 %v396
        %769 = vmatpush1.msra.mxu0 %v395
        %770 = vmatprep.subr.mxu0 %v404
        %771 = vmatpush1.msra.mxu0 %v403
        %772 = vmatprep.subr.mxu0 %v412
        %773 = vmatpush1.msra.mxu0 %v411
        %774 = vmatprep.subr.mxu0 %v420
        %775 = vmatpush1.msra.mxu0 %v419
        %776 = vmatprep.subr.mxu0 %v428
        %777 = vmatpush1.msra.mxu0 %v427
        %778 = vmatprep.subr.mxu0 %v436
        %779 = vmatpush1.msra.mxu0 %v435
        %780 = vmatprep.subr.mxu0 %v444
        %781 = vmatpush1.msra.mxu0 %v443
        %782 = vmatprep.subr.mxu0 %v452
        %783 = vmatpush1.msra.mxu0 %v451
        %784 = vmatprep.subr.mxu0 %v460
        %785 = vmatpush1.msra.mxu0 %v459
        %786 = vmatprep.subr.mxu0 %v468
        %787 = vmatpush1.msra.mxu0 %v467
        %788 = vmatprep.subr.mxu0 %v476
        %789 = vmatpush1.msra.mxu0 %v475
        %790 = vmatprep.subr.mxu0 %v484
        %791 = vmatpush1.msra.mxu0 %v483
        %792 = vmatprep.subr.mxu0 %v492
        %793 = vmatpush1.msra.mxu0 %v491
        %794 = vmatprep.subr.mxu0 %v500
        %795 = vmatpush1.msra.mxu0 %v499
        %796 = vmatprep.subr.mxu0 %v508
        %797 = vmatpush1.msra.mxu0 %v507
        %798 = vmatprep.subr.mxu0 %v516
        %799 = vmatpush1.msra.mxu0 %v515
        %800 = vmatprep.subr.mxu0 %v524
        %801 = vmatpush1.msra.mxu0 %v523
        %802 = vmatprep.mubr.f32.mxu0 %v267
        %803 = vmatmul.mubr.f32.gmra.mrb[0].mxu0 %v265
        %v804 = vpop.f32.mrb[0].mxu0
        %v805 = vadd.f32 0.0, %v804
        %v806 = vpop.f32.mrb[0].mxu0
        %v807 = vadd.f32 0.0, %v806
        %808 = vdwg.mxu0
        %809 = vst [vmem:[%s178] sm:$0xff] %v592
        %810 = vst [vmem:[%s178 + $0x8] sm:$0xff] %v594
        %811 = vst [vmem:[%s178 + $0x10] sm:$0xff] %v663
        %812 = vst [vmem:[%s178 + $0x18] sm:$0xff] %v665
        %813 = vst [vmem:[%s178 + $0x20] sm:$0xff] %v734
        %814 = vst [vmem:[%s178 + $0x28] sm:$0xff] %v736
        %815 = vst [vmem:[%s178 + $0x30] sm:$0xff] %v805
        %816 = vst [vmem:[%s178 + $0x38] sm:$0xff] %v807
        %s817 = sand.u32 %s94, 1
        %s818 = scalar_lea.sflag [#allocation4], %s817
        %s819 = sand.u32 %s94, 1
        %s820 = smul.addr %s819, 64
        %s821 = scalar_lea.vmem [#allocation5], %s820
        // Predicated region
        $region37: #{tpu_custom_call.1} parent=31 // pred_check
          %p822 = pneg %p104
        $region38: #{tpu_custom_call.1} parent=31 // pred_check_branch
          %824 = sbr.rel (%p822) target = $region40
        $region39: #{tpu_custom_call.1} parent=31 // pred_region
          %s826 = ssub.s32 1024, 1024
          %827 = vsyncadd %s818, %s826
          %s828 = smul.addr %s18, 8
          %s829 = smul.addr %s828, 128
          %s830 = scalar_lea.hbm %s3, %s829
          %s832 = sshll.u32 %s821, 4
          %s833 = int_to_ptr.vmem [resolvable:$true] %s832
          %835 = dma.vmem_to_hbm [thread:$0]  %s833, 1024, %s830, %s818
        $region40: #{tpu_custom_call.1} parent=31 // pred_fallthru
          _
      $region32: #{tpu_custom_call.1} parent=5 // pred_fallthru
        _
      %p836 = scmp.le.s32.totalorder 2, %s13
      // Predicated region
      $region41: #{tpu_custom_call.1} parent=5 // pred_check
        %p837 = pneg %p836
      $region42: #{tpu_custom_call.1} parent=5 // pred_check_branch
        %839 = sbr.rel (%p837) target = $region44
      $region43: #{tpu_custom_call.1} parent=5 // pred_region
        %s840 = ssub.s32 %s13, 2
        // Predicated region
        $region45: #{tpu_custom_call.1} parent=43 // pred_check
          %p841 = pneg %p110
        $region46: #{tpu_custom_call.1} parent=43 // pred_check_branch
          %843 = sbr.rel (%p841) target = $region48
        $region47: #{tpu_custom_call.1} parent=43 // pred_region
          %s844 = sand.u32 %s95, 1
          %s845 = scalar_lea.sflag [#allocation4], %s844
          %s846 = sand.u32 %s95, 1
          %s847 = smul.addr %s846, 64
          %s848 = scalar_lea.vmem [#allocation5], %s847
          %849 = dma.done %s845, 1024
        $region48: #{tpu_custom_call.1} parent=43 // pred_fallthru
          _
      $region44: #{tpu_custom_call.1} parent=5 // pred_fallthru
        _
    $region6: #{tpu_custom_call.1} parent=1 // loop_footer
      %s17 = sadd.s32 1, %s13
    $region7: #{tpu_custom_call.1} parent=1 // loop_footer_branch
      %12 = sbr.rel target = $region3
    $region8: #{tpu_custom_call.1} parent=1 // loop_exit
      _
    %850 = vsyncpa [#allocation3], 1
    %s851 = scalar_lea.sflag [#allocation3], 1
    %852 = vsyncpa %s851, 1
    %853 = vsyncpa [#allocation4], 1
    %s854 = scalar_lea.sflag [#allocation4], 1
    %855 = vsyncpa %s854, 1

</llo_original>
